<compile_context>
chip_gen: v6e
topology: v6e:2x2x1
jax: 0.10.0
libtpu: 0.0.40
codegen_flags: <defaults>
</compile_context>

<pallas_src>
import math
import jax
import jax.numpy as jnp
from jax.experimental import pallas as pl
from jax.experimental.pallas import tpu as pltpu


def _classifier_kernel(x_ref, w1_ref, b1_ref, w2_ref, b2_ref, o_ref):
    # hidden = relu(x @ W1 + b1)   -- bf16 MXU matmul, f32 accumulate/epilogue
    h = jnp.dot(x_ref[...], w1_ref[...], preferred_element_type=jnp.float32)
    h = jnp.maximum(h + b1_ref[...], 0.0)
    # logits = hidden @ W2 + b2
    y = jnp.dot(h.astype(w2_ref.dtype), w2_ref[...],
                preferred_element_type=jnp.float32)
    o_ref[...] = (y + b2_ref[...]).astype(o_ref.dtype)


def classifier_forward(x, w1, b1, w2, b2, *, tb_max=1024):
    """x: (B, latent) f32; w1: (latent, 16); b1: (1, 16); w2: (16, 2); b2: (1, 2).

    Weights are stored as (in_features, out_features), i.e. transposed vs
    PyTorch's (out, in); computes y = relu(x @ W1 + b1) @ W2 + b2 in f32.
    """
    B, latent = x.shape
    hidden = w1.shape[1]
    out_dim = w2.shape[1]

    # bf16 matmul operands (halve HBM traffic for x, hit native bf16 MXU).
    x_bf = x.astype(jnp.bfloat16)
    w1_bf = w1.astype(jnp.bfloat16)
    w2_bf = w2.astype(jnp.bfloat16)
    b1_f32 = b1.astype(jnp.float32)
    b2_f32 = b2.astype(jnp.float32)

    # Batch tile: multiple of 8 (sublane), capped well below scoped VMEM on all gens.
    tb = min(tb_max, ((B + 7) // 8) * 8)
    padded_b = ((B + tb - 1) // tb) * tb
    if padded_b != B:
        x_bf = jnp.pad(x_bf, ((0, padded_b - B), (0, 0)))
    grid = (padded_b // tb,)

    flops = 2 * padded_b * latent * hidden + 2 * padded_b * hidden * out_dim
    bytes_accessed = (2 * padded_b * latent        # x (bf16)
                      + 2 * latent * hidden        # w1 (bf16)
                      + 4 * hidden                 # b1 (f32)
                      + 2 * hidden * out_dim       # w2 (bf16)
                      + 4 * out_dim                # b2 (f32)
                      + 4 * padded_b * out_dim)    # out (f32)

    out = pl.pallas_call(
        _classifier_kernel,
        out_shape=jax.ShapeDtypeStruct((padded_b, out_dim), jnp.float32),
        grid=grid,
        in_specs=[
            pl.BlockSpec((tb, latent), lambda i: (i, 0)),        # x: streamed
            pl.BlockSpec((latent, hidden), lambda i: (0, 0)),    # w1: resident
            pl.BlockSpec((1, hidden), lambda i: (0, 0)),         # b1: resident
            pl.BlockSpec((hidden, out_dim), lambda i: (0, 0)),   # w2: resident
            pl.BlockSpec((1, out_dim), lambda i: (0, 0)),        # b2: resident
        ],
        out_specs=pl.BlockSpec((tb, out_dim), lambda i: (i, 0)),
        compiler_params=pltpu.CompilerParams(
            dimension_semantics=("parallel",),
        ),
        cost_estimate=pl.CostEstimate(
            flops=flops, transcendentals=0, bytes_accessed=bytes_accessed),
    )(x_bf, w1_bf, b1_f32, w2_bf, b2_f32)

    return out[:B] if padded_b != B else out


def init_params(key, latent_size, hidden=16, out=2, gain=0.5):
    """Deterministic xavier_uniform(gain=0.5) weights, zero biases (matches weights_init)."""
    k1, k2 = jax.random.split(key)

    def xavier(k, fan_in, fan_out):
        bound = gain * math.sqrt(6.0 / (fan_in + fan_out))
        # PyTorch weight is (out, in); we store the transpose (in, out).
        return jax.random.uniform(k, (fan_in, fan_out), jnp.float32, -bound, bound)

    w1 = xavier(k1, latent_size, hidden)
    b1 = jnp.zeros((1, hidden), jnp.float32)
    w2 = xavier(k2, hidden, out)
    b2 = jnp.zeros((1, out), jnp.float32)
    return w1, b1, w2, b2


if __name__ == "__main__":
    # Example config: latent_size=24, mito_size=8, mito=True -> effective latent = 32
    latent_size, mito_size, mito = 24, 8, True
    eff_latent = latent_size + mito_size if mito else latent_size
    batch = 8

    key = jax.random.PRNGKey(0)
    kx, kp = jax.random.split(key)
    x = jax.random.normal(kx, (batch, eff_latent), jnp.float32)
    w1, b1, w2, b2 = init_params(kp, eff_latent)

    out = classifier_forward(x, w1, b1, w2, b2)
    jax.block_until_ready(out)
    assert out.shape == (batch, 2)

    # Reference mimicking the kernel math (bf16 matmul operands, f32 accumulate).
    x_bf, w1_bf, w2_bf = (a.astype(jnp.bfloat16) for a in (x, w1, w2))
    h_ref = jnp.maximum(
        jnp.dot(x_bf, w1_bf, preferred_element_type=jnp.float32) + b1, 0.0)
    ref_bf16 = jnp.dot(h_ref.astype(jnp.bfloat16), w2_bf,
                       preferred_element_type=jnp.float32) + b2
    assert jnp.allclose(out, ref_bf16, atol=1e-4, rtol=1e-4)

    # Sanity vs full-f32 reference (bf16 rounding tolerance).
    ref_f32 = jnp.maximum(x @ w1 + b1, 0.0) @ w2 + b2
    assert jnp.allclose(out, ref_f32, atol=2e-2, rtol=2e-2)

    print("KERNEL_OK")
</pallas_src>

<mosaic_0001>
module attributes {stable_mosaic.version = 11 : i64} {
  func.func @_classifier_kernel(%arg0: i32, %arg1: memref<8x32xbf16, #tpu.memory_space<vmem>>, %arg2: memref<32x16xbf16, #tpu.memory_space<vmem>>, %arg3: memref<1x16xf32, #tpu.memory_space<vmem>>, %arg4: memref<16x2xbf16, #tpu.memory_space<vmem>>, %arg5: memref<1x2xf32, #tpu.memory_space<vmem>>, %arg6: memref<8x2xf32, #tpu.memory_space<vmem>>) attributes {dimension_semantics = [#tpu.dimension_semantics<parallel>], iteration_bounds = array<i64: 1>, scalar_prefetch = 0 : i64, scratch_operands = 0 : i64, tpu.core_type = #tpu.core_type<tc>, window_params = [{transform_indices = @transform_0, window_bounds = array<i64: 8, 32>}, {pipeline_mode = #tpu.pipeline_mode<synchronous>, transform_indices = @transform_1, window_bounds = array<i64: 32, 16>}, {pipeline_mode = #tpu.pipeline_mode<synchronous>, transform_indices = @transform_2, window_bounds = array<i64: 1, 16>}, {pipeline_mode = #tpu.pipeline_mode<synchronous>, transform_indices = @transform_3, window_bounds = array<i64: 16, 2>}, {pipeline_mode = #tpu.pipeline_mode<synchronous>, transform_indices = @transform_4, window_bounds = array<i64: 1, 2>}, {transform_indices = @transform_5, window_bounds = array<i64: 8, 2>}]} {
    %c0 = arith.constant 0 : index
    %c0_0 = arith.constant 0 : index
    %0 = vector.load %arg1[%c0, %c0_0] : memref<8x32xbf16, #tpu.memory_space<vmem>>, vector<8x32xbf16>
    %c0_1 = arith.constant 0 : index
    %c0_2 = arith.constant 0 : index
    %1 = vector.load %arg2[%c0_1, %c0_2] : memref<32x16xbf16, #tpu.memory_space<vmem>>, vector<32x16xbf16>
    %cst = arith.constant dense<0.000000e+00> : vector<8x16xf32>
    %2 = tpu.matmul %0, %1, %cst {dimension_numbers = #tpu.dot_dimension_numbers<[1], [0], [0], [1], [0, 0, 1, 1], [], []>} : vector<8x32xbf16>, vector<32x16xbf16>, vector<8x16xf32> -> vector<8x16xf32>
    %c0_3 = arith.constant 0 : index
    %c0_4 = arith.constant 0 : index
    %3 = vector.load %arg3[%c0_3, %c0_4] : memref<1x16xf32, #tpu.memory_space<vmem>>, vector<1x16xf32>
    %4 = vector.broadcast %3 : vector<1x16xf32> to vector<8x16xf32>
    %5 = arith.addf %2, %4 : vector<8x16xf32>
    %cst_5 = arith.constant 0.000000e+00 : f32
    %6 = vector.broadcast %cst_5 : f32 to vector<8x16xf32>
    %7 = arith.maximumf %5, %6 : vector<8x16xf32>
    %8 = arith.truncf %7 : vector<8x16xf32> to vector<8x16xbf16>
    %c0_6 = arith.constant 0 : index
    %c0_7 = arith.constant 0 : index
    %9 = vector.load %arg4[%c0_6, %c0_7] : memref<16x2xbf16, #tpu.memory_space<vmem>>, vector<16x2xbf16>
    %cst_8 = arith.constant dense<0.000000e+00> : vector<8x2xf32>
    %10 = tpu.matmul %8, %9, %cst_8 {dimension_numbers = #tpu.dot_dimension_numbers<[1], [0], [0], [1], [0, 0, 1, 1], [], []>} : vector<8x16xbf16>, vector<16x2xbf16>, vector<8x2xf32> -> vector<8x2xf32>
    %c0_9 = arith.constant 0 : index
    %c0_10 = arith.constant 0 : index
    %11 = vector.load %arg5[%c0_9, %c0_10] : memref<1x2xf32, #tpu.memory_space<vmem>>, vector<1x2xf32>
    %12 = vector.broadcast %11 : vector<1x2xf32> to vector<8x2xf32>
    %13 = arith.addf %10, %12 : vector<8x2xf32>
    %c0_11 = arith.constant 0 : index
    %c0_12 = arith.constant 0 : index
    %14 = vector.load %arg6[%c0_11, %c0_12] : memref<8x2xf32, #tpu.memory_space<vmem>>, vector<8x2xf32>
    tpu.vector_store %arg6[%c0_11, %c0_12], %13 {strides = array<i32>} : memref<8x2xf32, #tpu.memory_space<vmem>>, vector<8x2xf32>,
    return
  }
  func.func @transform_0(%arg0: i32) -> (i32, i32) {
    %c0_i32 = arith.constant 0 : i32
    %c0_i32_0 = arith.constant 0 : i32
    return %arg0, %c0_i32 : i32, i32
  }
  func.func @transform_1(%arg0: i32) -> (i32, i32) {
    %c0_i32 = arith.constant 0 : i32
    %c0_i32_0 = arith.constant 0 : i32
    %c0_i32_1 = arith.constant 0 : i32
    return %c0_i32, %c0_i32_0 : i32, i32
  }
  func.func @transform_2(%arg0: i32) -> (i32, i32) {
    %c0_i32 = arith.constant 0 : i32
    %c0_i32_0 = arith.constant 0 : i32
    %c0_i32_1 = arith.constant 0 : i32
    return %c0_i32, %c0_i32_0 : i32, i32
  }
  func.func @transform_3(%arg0: i32) -> (i32, i32) {
    %c0_i32 = arith.constant 0 : i32
    %c0_i32_0 = arith.constant 0 : i32
    %c0_i32_1 = arith.constant 0 : i32
    return %c0_i32, %c0_i32_0 : i32, i32
  }
  func.func @transform_4(%arg0: i32) -> (i32, i32) {
    %c0_i32 = arith.constant 0 : i32
    %c0_i32_0 = arith.constant 0 : i32
    %c0_i32_1 = arith.constant 0 : i32
    return %c0_i32, %c0_i32_0 : i32, i32
  }
  func.func @transform_5(%arg0: i32) -> (i32, i32) {
    %c0_i32 = arith.constant 0 : i32
    %c0_i32_0 = arith.constant 0 : i32
    return %arg0, %c0_i32 : i32, i32
  }
}

</mosaic_0001>

<llo_original>
// kernel: tpu_custom_call.1
$region0: #{tpu_custom_call.1}
  #allocation0 [shape = 'u32[]', space=smem, size = 0x4, offset = 0x4, fixed_abs, tag = 'smem constant byte address 0x4 - core index']
  #allocation1 [shape = 'u32[144,128]{1,0:T(1,128)}', space=vmem, size = 0x12000, scoped, tag = 'internal scratch']
  %s0 = inlined_call_operand.vmem [shape: bf16[8,32], index: 0, kind: input, shape index: {}]
  %s1 = inlined_call_operand.vmem [shape: bf16[32,16], index: 1, kind: input, shape index: {}]
  %s2 = inlined_call_operand.vmem [shape: f32[1,16], index: 2, kind: input, shape index: {}]
  %s3 = inlined_call_operand.vmem [shape: bf16[16,2], index: 3, kind: input, shape index: {}]
  %s4 = inlined_call_operand.vmem [shape: f32[1,2], index: 4, kind: input, shape index: {}]
  %s5 = inlined_call_operand.vmem [shape: f32[8,2], index: 5, kind: output, shape index: {}]
  %s6 = sld [smem:[#allocation0]]
  $region30: #{tpu_custom_call.1} parent=0
    _
  %s8 = ssub.s32 1, %s6
  %s9 = scalar_select 0, %s8, %s6
  // Predicated region
  $region2: #{tpu_custom_call.1} parent=0 // pred_check
    _
  $region3: #{tpu_custom_call.1} parent=0 // pred_check_branch
    %11 = sbr.rel (0) target = $region5
  $region4: #{tpu_custom_call.1} parent=0 // pred_region
    _
  $region5: #{tpu_custom_call.1} parent=0 // pred_fallthru
    _
  // Predicated region
  $region6: #{tpu_custom_call.1} parent=0 // pred_check
    _
  $region7: #{tpu_custom_call.1} parent=0 // pred_check_branch
    %13 = sbr.rel (0) target = $region9
  $region8: #{tpu_custom_call.1} parent=0 // pred_region
    _
  $region9: #{tpu_custom_call.1} parent=0 // pred_fallthru
    _
  // Predicated region
  $region10: #{tpu_custom_call.1} parent=0 // pred_check
    _
  $region11: #{tpu_custom_call.1} parent=0 // pred_check_branch
    %15 = sbr.rel (0) target = $region13
  $region12: #{tpu_custom_call.1} parent=0 // pred_region
    _
  $region13: #{tpu_custom_call.1} parent=0 // pred_fallthru
    _
  // Predicated region
  $region14: #{tpu_custom_call.1} parent=0 // pred_check
    _
  $region15: #{tpu_custom_call.1} parent=0 // pred_check_branch
    %17 = sbr.rel (0) target = $region17
  $region16: #{tpu_custom_call.1} parent=0 // pred_region
    _
  $region17: #{tpu_custom_call.1} parent=0 // pred_fallthru
    _
  // Predicated region
  $region18: #{tpu_custom_call.1} parent=0 // pred_check
    _
  $region19: #{tpu_custom_call.1} parent=0 // pred_check_branch
    %19 = sbr.rel (0) target = $region21
  $region20: #{tpu_custom_call.1} parent=0 // pred_region
    _
  $region21: #{tpu_custom_call.1} parent=0 // pred_fallthru
    _
  %v21 = vld [vmem:[%s0] sm:$0xf]
  %v22 = vld [vmem:[%s1] sm:$0xf]
  %v23 = vld [vmem:[%s1 + $0x4] sm:$0xf]
  %v24 = vld [vmem:[%s1 + $0x8] sm:$0xf]
  %v25 = vld [vmem:[%s1 + $0xc] sm:$0xf]
  %v26 = vld [vmem:[%s2] sm:$0x1]
  %v28 = vlaneseq
  %v29 = vshrl.u32 %v28, 7
  %v30 = vsub.s32 0, %v29
  %v31 = vrot.slane %v26, %v30
  %v37 = vunpack.c.l.b16 %v22
  %v38 = vunpack.c.l.b16 %v23
  %v39 = vunpack.c.l.b16 %v24
  %v40 = vunpack.c.l.b16 %v25
  %v41 = vpack.c.b16 %v38, %v37
  %v42 = vpack.c.b16 %v40, %v39
  %vm45 = vcmask 261120
  %v47 = vsel %vm45, %v21, 0
  %49 = vmatprep.subr.bf16.mxu0 0
  %50 = vmatpush1.bf16.msra.mxu0 0
  %51 = vmatprep.subr.bf16.mxu0 0
  %52 = vmatpush1.bf16.msra.mxu0 0
  %53 = vmatprep.subr.bf16.mxu0 0
  %54 = vmatpush1.bf16.msra.mxu0 0
  %55 = vmatprep.subr.bf16.mxu0 0
  %56 = vmatpush1.bf16.msra.mxu0 0
  %57 = vmatprep.subr.bf16.mxu0 0
  %58 = vmatpush1.bf16.msra.mxu0 0
  %59 = vmatprep.subr.bf16.mxu0 0
  %60 = vmatpush1.bf16.msra.mxu0 0
  %61 = vmatprep.subr.bf16.mxu0 0
  %62 = vmatpush1.bf16.msra.mxu0 %v42
  %63 = vmatprep.subr.bf16.mxu0 0
  %64 = vmatpush1.bf16.msra.mxu0 %v41
  %65 = vmatprep.subr.bf16.mxu0 0
  %66 = vmatpush2.bf16.msra.mxu0 0
  %67 = vmatprep.subr.bf16.mxu0 0
  %68 = vmatpush2.bf16.msra.mxu0 0
  %69 = vmatprep.subr.bf16.mxu0 0
  %70 = vmatpush2.bf16.msra.mxu0 0
  %71 = vmatprep.subr.bf16.mxu0 0
  %72 = vmatpush2.bf16.msra.mxu0 0
  %73 = vmatprep.subr.bf16.mxu0 0
  %74 = vmatpush2.bf16.msra.mxu0 0
  %75 = vmatprep.subr.bf16.mxu0 0
  %76 = vmatpush2.bf16.msra.mxu0 0
  %77 = vmatprep.subr.bf16.mxu0 0
  %78 = vmatpush2.bf16.msra.mxu0 0
  %79 = vmatprep.subr.bf16.mxu0 0
  %80 = vmatpush2.bf16.msra.mxu0 0
  %81 = vmatprep.mubr.bf16.mxu0 0
  %82 = vmatmul.mubr.bf16.gmra.mxu0 %v47
  %v83 = vpop.f32.mrf.mxu0
  %v84 = vadd.f32 %v31, %v83
  %v85 = vpop.f32.mrf.mxu0
  %v86 = vpop.f32.mrf.mxu0
  %v87 = vpop.f32.mrf.mxu0
  %88 = vdwg.mxu0
  %v89 = vmax.f32 %v84, 0.0
  %v90 = vpack.c.bf16 %v89, %v89
  %v91 = vld [vmem:[%s3] sm:$0xf]
  %v92 = vld [vmem:[%s3 + $0x4] sm:$0xf]
  %v93 = vld [vmem:[%s4] sm:$0x1]
  %v95 = vlaneseq
  %v96 = vshrl.u32 %v95, 7
  %v97 = vsub.s32 0, %v96
  %v98 = vrot.slane %v93, %v97
  %v102 = vunpack.c.l.b16 %v91
  %v103 = vunpack.c.l.b16 %v92
  %v104 = vpack.c.b16 %v103, %v102
  %vm106 = vcmask 130048
  %v108 = vsel %vm106, %v90, 0
  %110 = vmatprep.subr.bf16.mxu0 0
  %111 = vmatpush1.bf16.msra.mxu0 0
  %112 = vmatprep.subr.bf16.mxu0 0
  %113 = vmatpush1.bf16.msra.mxu0 0
  %114 = vmatprep.subr.bf16.mxu0 0
  %115 = vmatpush1.bf16.msra.mxu0 0
  %116 = vmatprep.subr.bf16.mxu0 0
  %117 = vmatpush1.bf16.msra.mxu0 0
  %118 = vmatprep.subr.bf16.mxu0 0
  %119 = vmatpush1.bf16.msra.mxu0 0
  %120 = vmatprep.subr.bf16.mxu0 0
  %121 = vmatpush1.bf16.msra.mxu0 0
  %122 = vmatprep.subr.bf16.mxu0 0
  %123 = vmatpush1.bf16.msra.mxu0 0
  %124 = vmatprep.subr.bf16.mxu0 0
  %125 = vmatpush1.bf16.msra.mxu0 %v104
  %126 = vmatprep.subr.bf16.mxu0 0
  %127 = vmatpush2.bf16.msra.mxu0 0
  %128 = vmatprep.subr.bf16.mxu0 0
  %129 = vmatpush2.bf16.msra.mxu0 0
  %130 = vmatprep.subr.bf16.mxu0 0
  %131 = vmatpush2.bf16.msra.mxu0 0
  %132 = vmatprep.subr.bf16.mxu0 0
  %133 = vmatpush2.bf16.msra.mxu0 0
  %134 = vmatprep.subr.bf16.mxu0 0
  %135 = vmatpush2.bf16.msra.mxu0 0
  %136 = vmatprep.subr.bf16.mxu0 0
  %137 = vmatpush2.bf16.msra.mxu0 0
  %138 = vmatprep.subr.bf16.mxu0 0
  %139 = vmatpush2.bf16.msra.mxu0 0
  %140 = vmatprep.subr.bf16.mxu0 0
  %141 = vmatpush2.bf16.msra.mxu0 0
  %142 = vmatprep.mubr.bf16.mxu0 0
  %143 = vmatmul.mubr.bf16.gmra.mxu0 %v108
  %v144 = vpop.f32.mrf.mxu0
  %v145 = vadd.f32 %v98, %v144
  %v146 = vpop.f32.mrf.mxu0
  %v147 = vpop.f32.mrf.mxu0
  %v148 = vpop.f32.mrf.mxu0
  %149 = vdwg.mxu0
  %vm150 = vcmask 15360
  %151 = vst.msk [vmem:[%s5] sm:$0xff] %vm150, %v145
  // Predicated region
  $region22: #{tpu_custom_call.1} parent=0 // pred_check
    _
  $region23: #{tpu_custom_call.1} parent=0 // pred_check_branch
    %153 = sbr.rel (0) target = $region25
  $region24: #{tpu_custom_call.1} parent=0 // pred_region
    _
  $region25: #{tpu_custom_call.1} parent=0 // pred_fallthru
    _
  // Predicated region
  $region26: #{tpu_custom_call.1} parent=0 // pred_check
    _
  $region27: #{tpu_custom_call.1} parent=0 // pred_check_branch
    %155 = sbr.rel (0) target = $region29
  $region28: #{tpu_custom_call.1} parent=0 // pred_region
    _
  $region29: #{tpu_custom_call.1} parent=0 // pred_fallthru
    _

</llo_original>
